<compile_context>
chip_gen: v7x
topology: tpu7x:2x2x1
jax: 0.10.0
libtpu: 0.0.40
codegen_flags: <defaults>
</compile_context>

<pallas_src>
import functools
import math

import jax
import jax.numpy as jnp
from jax.experimental import pallas as pl
from jax.experimental.pallas import tpu as pltpu


def _label_smoothing_kernel(x_ref, tgt_ref, out_ref, *,
                            n_rows, tile_n, padding_idx,
                            confidence, smooth_val, const_plogp):
    i = pl.program_id(0)
    x = x_ref[...].astype(jnp.float32)                       # (tile_n, V)
    tgt = tgt_ref[...]                                       # (tile_n, 1) int32

    # log-softmax pieces (only row reductions; log-probs never materialized).
    m = jnp.max(x, axis=1, keepdims=True)                    # (tile_n, 1)
    lse = jnp.log(jnp.sum(jnp.exp(x - m), axis=1, keepdims=True))

    # Single weighted row reduction replacing sum_z + z_tgt:
    #   w_j = smooth_val + (confidence - smooth_val) * [j == tgt],  sum_j w_j == 1
    #   kl_row = C - sum_j w_j * x_j + m + lse
    col = jax.lax.broadcasted_iota(jnp.int32, x.shape, 1)
    w = jnp.where(col == tgt, jnp.float32(confidence), jnp.float32(smooth_val))
    wsum = jnp.sum(w * x, axis=1, keepdims=True)              # (tile_n, 1)

    kl_row = jnp.float32(const_plogp) - wsum + m + lse

    # Validity from the GLOBAL row index (handles the ragged last tile whose
    # out-of-range rows contain unspecified data) AND the padding mask.
    row = jax.lax.broadcasted_iota(jnp.int32, tgt.shape, 0) + i * tile_n
    valid = (row < n_rows) & (tgt != padding_idx)
    kl_row = jnp.where(valid, kl_row, 0.0)

    kl_sum = jnp.sum(kl_row)
    cnt = jnp.sum(valid.astype(jnp.float32))

    # Lane-dense per-tile partial block: [0,0]=kl partial, [0,1]=count, rest 0.
    sub = jax.lax.broadcasted_iota(jnp.int32, (8, 128), 0)
    lane = jax.lax.broadcasted_iota(jnp.int32, (8, 128), 1)
    out_ref[...] = jnp.where((sub == 0) & (lane == 0), kl_sum,
                             jnp.where((sub == 0) & (lane == 1), cnt,
                                       jnp.float32(0.0)))


def _sublane_multiple(dtype):
    itemsize = jnp.dtype(dtype).itemsize
    if itemsize >= 4:
        return 8
    if itemsize == 2:
        return 16
    return 32


def _choose_tile_n(n_rows, vocab, dtype, target_bytes=2 * 1024 * 1024):
    """Row tile sized so each HBM block (in the input dtype) is ~target_bytes."""
    mult = _sublane_multiple(dtype)
    itemsize = jnp.dtype(dtype).itemsize
    v_eff = ((vocab + 127) // 128) * 128                      # lane-padded vocab
    tn = max(mult, (target_bytes // (v_eff * itemsize)) // mult * mult)
    # Never larger than the (sublane-rounded) total row count.
    n_round = ((n_rows + mult - 1) // mult) * mult
    tn = min(tn, n_round)
    # Keep >= 2 grid steps when possible so v7x megacore can split the grid.
    if n_round > mult:
        half = ((pl.cdiv(n_rows, 2) + mult - 1) // mult) * mult
        tn = min(tn, max(mult, half))
    return int(tn)


def label_smoothing_loss(x, target, *, size, padding_idx, smoothing,
                         normalize_length=False, tile_n=None,
                         block_bytes=2 * 1024 * 1024):
    """x: (B, T, V) float (f32 or bf16), target: (B, T) int -> scalar f32 loss."""
    B, T, V = x.shape
    assert V == size
    N = B * T

    x2 = x.reshape(N, V)
    tgt2 = target.reshape(N, 1).astype(jnp.int32)

    if tile_n is None:
        tile_n = _choose_tile_n(N, V, x.dtype, block_bytes)

    num_tiles = int(pl.cdiv(N, tile_n))                       # no wrapper-side pad

    confidence = 1.0 - smoothing
    smooth_val = smoothing / (size - 1)
    const_plogp = 0.0                                         # sum_j p_j*log p_j (0*log0:=0)
    if confidence > 0.0:
        const_plogp += confidence * math.log(confidence)
    if smooth_val > 0.0:
        const_plogp += (size - 1) * smooth_val * math.log(smooth_val)

    kernel = functools.partial(_label_smoothing_kernel,
                               n_rows=N,
                               tile_n=tile_n,
                               padding_idx=padding_idx,
                               confidence=confidence,
                               smooth_val=smooth_val,
                               const_plogp=const_plogp)

    partials = pl.pallas_call(
        kernel,
        out_shape=jax.ShapeDtypeStruct((num_tiles * 8, 128), jnp.float32),
        grid_spec=pltpu.PrefetchScalarGridSpec(
            num_scalar_prefetch=0,
            grid=(num_tiles,),
            in_specs=[
                pl.BlockSpec((tile_n, V), lambda i: (i, 0)),
                pl.BlockSpec((tile_n, 1), lambda i: (i, 0)),
            ],
            out_specs=pl.BlockSpec((8, 128), lambda i: (i, 0)),
        ),
        compiler_params=pltpu.CompilerParams(
            dimension_semantics=("parallel",),
            vmem_limit_bytes=40 * 1024 * 1024),
    )(x2, tgt2)

    totals = jnp.sum(partials, axis=0)                        # (128,): [0]=kl sum, [1]=count
    kl_sum = totals[0]
    total_valid = totals[1]

    # NOTE: if every token is padding and normalize_length=True, this is NaN
    # (same behavior as the PyTorch reference).
    denom = total_valid if normalize_length else jnp.float32(B)
    return kl_sum / denom


def _reference(x, target, *, size, padding_idx, smoothing, normalize_length):
    B, T, V = x.shape
    x2 = x.reshape(-1, V).astype(jnp.float32)
    tgt = target.reshape(-1)
    confidence = 1.0 - smoothing
    ignore = tgt == padding_idx
    total = tgt.shape[0] - jnp.sum(ignore)
    tgt_c = jnp.where(ignore, 0, tgt)
    true_dist = jnp.full_like(x2, smoothing / (size - 1))
    true_dist = true_dist.at[jnp.arange(x2.shape[0]), tgt_c].set(confidence)
    logp = jax.nn.log_softmax(x2, axis=1)
    kl = true_dist * (jnp.log(jnp.maximum(true_dist, 1e-30)) - logp)
    kl = jnp.where(ignore[:, None], 0.0, kl)
    denom = total if normalize_length else B
    return jnp.sum(kl) / denom


if __name__ == "__main__":
    size_v = 32
    padding_idx = -1
    smoothing = 0.1

    key = jax.random.PRNGKey(0)
    ok = True
    # (2, 8): N=16 divides the auto tile; (2, 9): N=18 exercises the ragged last tile.
    for (B, T) in ((2, 8), (2, 9)):
        key, kx, kt, kp = jax.random.split(key, 4)
        x = jax.random.normal(kx, (B, T, size_v), dtype=jnp.float32)
        target = jax.random.randint(kt, (B, T), 0, size_v, dtype=jnp.int32)
        pad_mask = jax.random.bernoulli(kp, 0.25, (B, T))
        target = jnp.where(pad_mask, padding_idx, target)

        for norm_len in (False, True):
            loss = label_smoothing_loss(x, target, size=size_v,
                                        padding_idx=padding_idx,
                                        smoothing=smoothing,
                                        normalize_length=norm_len)
            loss = jax.block_until_ready(loss)
            ref = _reference(x, target, size=size_v, padding_idx=padding_idx,
                             smoothing=smoothing, normalize_length=norm_len)
            good = bool(jnp.allclose(loss, ref, rtol=1e-5, atol=1e-5))
            assert good, ((B, T), norm_len, loss, ref)
            ok = ok and good

    if ok:
        print("KERNEL_OK")
</pallas_src>

<mosaic_0001>
module attributes {stable_mosaic.version = 11 : i64} {
  func.func @_label_smoothing_kernel(%arg0: i32, %arg1: memref<8x32xf32, #tpu.memory_space<vmem>>, %arg2: memref<8x1xi32, #tpu.memory_space<vmem>>, %arg3: memref<8x128xf32, #tpu.memory_space<vmem>>) attributes {dimension_semantics = [#tpu.dimension_semantics<parallel>], iteration_bounds = array<i64: 2>, scalar_prefetch = 0 : i64, scratch_operands = 0 : i64, tpu.core_type = #tpu.core_type<tc>, window_params = [{transform_indices = @transform_0, window_bounds = array<i64: 8, 32>}, {transform_indices = @transform_1, window_bounds = array<i64: 8, 1>}, {transform_indices = @transform_2, window_bounds = array<i64: 8, 128>}]} {
    %c0 = arith.constant 0 : index
    %c0_0 = arith.constant 0 : index
    %0 = vector.load %arg1[%c0, %c0_0] : memref<8x32xf32, #tpu.memory_space<vmem>>, vector<8x32xf32>
    %c0_1 = arith.constant 0 : index
    %c0_2 = arith.constant 0 : index
    %1 = vector.load %arg2[%c0_1, %c0_2] : memref<8x1xi32, #tpu.memory_space<vmem>>, vector<8x1xi32>
    %cst = arith.constant dense<0xFF800000> : vector<8xf32>
    %2 = vector.multi_reduction <maximumf>, %0, %cst [1] : vector<8x32xf32> to vector<8xf32>
    %3 = vector.shape_cast %2 : vector<8xf32> to vector<8x1xf32>
    %4 = vector.broadcast %3 : vector<8x1xf32> to vector<8x32xf32>
    %5 = arith.subf %0, %4 : vector<8x32xf32>
    %6 = math.exp %5 : vector<8x32xf32>
    %cst_3 = arith.constant dense<0.000000e+00> : vector<8xf32>
    %7 = vector.multi_reduction <add>, %6, %cst_3 [1] : vector<8x32xf32> to vector<8xf32>
    %8 = vector.shape_cast %7 : vector<8xf32> to vector<8x1xf32>
    %9 = math.log %8 : vector<8x1xf32>
    %10 = tpu.iota {dimensions = array<i32: 1>} : vector<8x32xi32>
    %11 = vector.broadcast %1 : vector<8x1xi32> to vector<8x32xi32>
    %12 = arith.cmpi eq, %10, %11 : vector<8x32xi32>
    %cst_4 = arith.constant 0.899999976 : f32
    %cst_5 = arith.constant 0.0032258064 : f32
    %13 = vector.broadcast %cst_4 : f32 to vector<8x32xf32>
    %14 = vector.broadcast %cst_5 : f32 to vector<8x32xf32>
    %15 = arith.select %12, %13, %14 : vector<8x32xi1>, vector<8x32xf32>
    %16 = arith.mulf %15, %0 : vector<8x32xf32>
    %cst_6 = arith.constant dense<0.000000e+00> : vector<8xf32>
    %17 = vector.multi_reduction <add>, %16, %cst_6 [1] : vector<8x32xf32> to vector<8xf32>
    %18 = vector.shape_cast %17 : vector<8xf32> to vector<8x1xf32>
    %cst_7 = arith.constant -0.668481708 : f32
    %19 = vector.broadcast %cst_7 : f32 to vector<8x1xf32>
    %20 = arith.subf %19, %18 : vector<8x1xf32>
    %21 = arith.addf %20, %3 : vector<8x1xf32>
    %22 = arith.addf %21, %9 : vector<8x1xf32>
    %23 = tpu.iota {dimensions = array<i32: 0>} : vector<8x1xi32>
    %c8_i32 = arith.constant 8 : i32
    %24 = arith.muli %arg0, %c8_i32 : i32
    %25 = vector.broadcast %24 : i32 to vector<8x1xi32>
    %26 = arith.addi %23, %25 : vector<8x1xi32>
    %c16_i32 = arith.constant 16 : i32
    %27 = vector.broadcast %c16_i32 : i32 to vector<8x1xi32>
    %28 = arith.cmpi slt, %26, %27 : vector<8x1xi32>
    %c-1_i32 = arith.constant -1 : i32
    %29 = vector.broadcast %c-1_i32 : i32 to vector<8x1xi32>
    %30 = arith.cmpi ne, %1, %29 : vector<8x1xi32>
    %31 = arith.andi %28, %30 : vector<8x1xi1>
    %cst_8 = arith.constant 0.000000e+00 : f32
    %32 = vector.broadcast %cst_8 : f32 to vector<8x1xf32>
    %33 = arith.select %31, %22, %32 : vector<8x1xi1>, vector<8x1xf32>
    %34 = vector.shape_cast %33 : vector<8x1xf32> to vector<1x8x1xf32>
    %cst_9 = arith.constant dense<0.000000e+00> : vector<1xf32>
    %35 = vector.multi_reduction <add>, %34, %cst_9 [1, 2] : vector<1x8x1xf32> to vector<1xf32>
    %36 = vector.shape_cast %35 : vector<1xf32> to vector<1x1x1xf32>
    %37 = vector.extract %36[0, 0, 0] : f32 from vector<1x1x1xf32>
    %38 = arith.extui %31 : vector<8x1xi1> to vector<8x1xi32>
    %39 = arith.sitofp %38 : vector<8x1xi32> to vector<8x1xf32>
    %40 = vector.shape_cast %39 : vector<8x1xf32> to vector<1x8x1xf32>
    %cst_10 = arith.constant dense<0.000000e+00> : vector<1xf32>
    %41 = vector.multi_reduction <add>, %40, %cst_10 [1, 2] : vector<1x8x1xf32> to vector<1xf32>
    %42 = vector.shape_cast %41 : vector<1xf32> to vector<1x1x1xf32>
    %43 = vector.extract %42[0, 0, 0] : f32 from vector<1x1x1xf32>
    %44 = tpu.iota {dimensions = array<i32: 0>} : vector<8x128xi32>
    %45 = tpu.iota {dimensions = array<i32: 1>} : vector<8x128xi32>
    %c0_i32 = arith.constant 0 : i32
    %46 = vector.broadcast %c0_i32 : i32 to vector<8x128xi32>
    %47 = arith.cmpi eq, %44, %46 : vector<8x128xi32>
    %c0_i32_11 = arith.constant 0 : i32
    %48 = vector.broadcast %c0_i32_11 : i32 to vector<8x128xi32>
    %49 = arith.cmpi eq, %45, %48 : vector<8x128xi32>
    %50 = arith.andi %47, %49 : vector<8x128xi1>
    %c0_i32_12 = arith.constant 0 : i32
    %51 = vector.broadcast %c0_i32_12 : i32 to vector<8x128xi32>
    %52 = arith.cmpi eq, %44, %51 : vector<8x128xi32>
    %c1_i32 = arith.constant 1 : i32
    %53 = vector.broadcast %c1_i32 : i32 to vector<8x128xi32>
    %54 = arith.cmpi eq, %45, %53 : vector<8x128xi32>
    %55 = arith.andi %52, %54 : vector<8x128xi1>
    %cst_13 = arith.constant 0.000000e+00 : f32
    %56 = vector.broadcast %43 : f32 to vector<8x128xf32>
    %57 = vector.broadcast %cst_13 : f32 to vector<8x128xf32>
    %58 = arith.select %55, %56, %57 : vector<8x128xi1>, vector<8x128xf32>
    %59 = vector.broadcast %37 : f32 to vector<8x128xf32>
    %60 = arith.select %50, %59, %58 : vector<8x128xi1>, vector<8x128xf32>
    %c0_14 = arith.constant 0 : index
    %c0_15 = arith.constant 0 : index
    %61 = vector.load %arg3[%c0_14, %c0_15] : memref<8x128xf32, #tpu.memory_space<vmem>>, vector<8x128xf32>
    tpu.vector_store %arg3[%c0_14, %c0_15], %60 {strides = array<i32>} : memref<8x128xf32, #tpu.memory_space<vmem>>, vector<8x128xf32>,
    return
  }
  func.func @transform_0(%arg0: i32) -> (i32, i32) {
    %c0_i32 = arith.constant 0 : i32
    %c0_i32_0 = arith.constant 0 : i32
    return %arg0, %c0_i32 : i32, i32
  }
  func.func @transform_1(%arg0: i32) -> (i32, i32) {
    %c0_i32 = arith.constant 0 : i32
    %c0_i32_0 = arith.constant 0 : i32
    return %arg0, %c0_i32 : i32, i32
  }
  func.func @transform_2(%arg0: i32) -> (i32, i32) {
    %c0_i32 = arith.constant 0 : i32
    %c0_i32_0 = arith.constant 0 : i32
    return %arg0, %c0_i32 : i32, i32
  }
}

</mosaic_0001>

<llo_original>
// kernel: tpu_custom_call.1
$region0: #{tpu_custom_call.1}
  #allocation0 [shape = 'u32[]', space=smem, size = 0x4, offset = 0x4, fixed_abs, tag = 'smem constant byte address 0x4 - core index']
  #allocation1 [shape = 'u32[144,128]{1,0:T(1,128)}', space=vmem, size = 0x12000, scoped, tag = 'internal scratch']
  %s0 = inlined_call_operand.vmem [shape: f32[16,32], index: 0, kind: input, shape index: {}]
  %s1 = inlined_call_operand.vmem [shape: s32[16,1], index: 1, kind: input, shape index: {}]
  %s2 = inlined_call_operand.hbm [shape: f32[16,128], index: 2, kind: output, shape index: {}]
  %s3 = sld [smem:[#allocation0]]
  $region41: #{tpu_custom_call.1} parent=0
    _
  %s5 = ssub.s32 1, %s3
  %s6 = scalar_select 0, %s5, %s3
  $region1: #{tpu_custom_call.1} parent=0
    #allocation2 [shape = 'u8[8192]{0}', space=vmem, size = 0x2000, scoped, tag = 'output window, operand 0']
    #allocation3 [shape = 's32[2]{0}', space=sflag, size = 0x8, scoped, tag = 'scoped memory for tpu_custom_call.1']
    %7 = vsyncpa [#allocation3], 0
    %s8 = scalar_lea.sflag [#allocation3], 1
    %9 = vsyncpa %s8, 0
    loop: start=0, step=1, limit=4
    $region2: #{tpu_custom_call.1} parent=1 // loop_pre_header
      _
    $region3: #{tpu_custom_call.1} parent=1 // loop_header
      %s11 = sphi 0, %s15
      %p12 = scmp.ge.s32.totalorder %s11, 4
      %s21 = sphi 0, %s23
      %s24 = sphi 0, %s21
      %s25 = sphi 0, %s24
      %s41 = sphi 0, %s25
      %s47 = sphi 0, %s49
      %s50 = sphi 0, %s47
      %s51 = sphi 0, %s50
      %s67 = sphi 0, %s51
      %s73 = sphi 0, %s75
      %s76 = sphi 0, %s73
      %s77 = sphi 0, %s76
      %s93 = sphi 0, %s77
    $region4: #{tpu_custom_call.1} parent=1 // loop_header_branch
      %14 = sbr.rel (%p12) target = $region8
    $region5: #{tpu_custom_call.1} parent=1 // loop_body
      %s16 = ssub.s32 %s11, 1
      %s17 = ssub.s32 %s11, 2
      %s18 = sadd.s32 %s11, 1
      %s19 = ssub.s32 %s11, %s18
      %p20 = scmp.eq.s32.totalorder %s19, 0
      %s22 = sadd.s32 %s21, 1
      %s23 = scalar_select %p20, %s21, %s22
      %p26 = pneg %p20
      %p27 = scmp.eq.s32.totalorder %s11, 1
      %p28 = por %p26, %p27
      %p29 = scmp.ne.s32.totalorder %s21, %s24
      %p30 = scmp.eq.s32.totalorder %s11, 0
      %p31 = por %p29, %p30
      %p32 = scmp.ne.s32.totalorder %s21, %s24
      %p33 = scmp.eq.s32.totalorder %s16, 1
      %p34 = por %p32, %p33
      %p35 = scmp.ne.s32.totalorder %s24, %s25
      %p36 = scmp.eq.s32.totalorder %s16, 0
      %p37 = por %p35, %p36
      %p38 = scmp.ne.s32.totalorder %s24, %s25
      %p39 = scmp.eq.s32.totalorder %s17, 1
      %p40 = por %p38, %p39
      %p42 = scmp.ne.s32.totalorder %s25, %s41
      %p43 = scmp.eq.s32.totalorder %s17, 0
      %p44 = por %p42, %p43
      %s45 = ssub.s32 %s11, %s18
      %p46 = scmp.eq.s32.totalorder %s45, 0
      %s48 = sadd.s32 %s47, 1
      %s49 = scalar_select %p46, %s47, %s48
      %p52 = pneg %p46
      %p53 = scmp.eq.s32.totalorder %s11, 1
      %p54 = por %p52, %p53
      %p55 = scmp.ne.s32.totalorder %s47, %s50
      %p56 = scmp.eq.s32.totalorder %s11, 0
      %p57 = por %p55, %p56
      %p58 = scmp.ne.s32.totalorder %s47, %s50
      %p59 = scmp.eq.s32.totalorder %s16, 1
      %p60 = por %p58, %p59
      %p61 = scmp.ne.s32.totalorder %s50, %s51
      %p62 = scmp.eq.s32.totalorder %s16, 0
      %p63 = por %p61, %p62
      %p64 = scmp.ne.s32.totalorder %s50, %s51
      %p65 = scmp.eq.s32.totalorder %s17, 1
      %p66 = por %p64, %p65
      %p68 = scmp.ne.s32.totalorder %s51, %s67
      %p69 = scmp.eq.s32.totalorder %s17, 0
      %p70 = por %p68, %p69
      %s71 = ssub.s32 %s11, %s18
      %p72 = scmp.eq.s32.totalorder %s71, 0
      %s74 = sadd.s32 %s73, 1
      %s75 = scalar_select %p72, %s73, %s74
      %p78 = pneg %p72
      %p79 = scmp.eq.s32.totalorder %s11, 1
      %p80 = por %p78, %p79
      %p81 = scmp.ne.s32.totalorder %s73, %s76
      %p82 = scmp.eq.s32.totalorder %s11, 0
      %p83 = por %p81, %p82
      %p84 = scmp.ne.s32.totalorder %s73, %s76
      %p85 = scmp.eq.s32.totalorder %s16, 1
      %p86 = por %p84, %p85
      %p87 = scmp.ne.s32.totalorder %s76, %s77
      %p88 = scmp.eq.s32.totalorder %s16, 0
      %p89 = por %p87, %p88
      %p90 = scmp.ne.s32.totalorder %s76, %s77
      %p91 = scmp.eq.s32.totalorder %s17, 1
      %p92 = por %p90, %p91
      %p94 = scmp.ne.s32.totalorder %s77, %s93
      %p95 = scmp.eq.s32.totalorder %s17, 0
      %p96 = por %p94, %p95
      %p97 = scmp.le.s32.totalorder 1, %s11
      %p98 = scmp.lt.s32.totalorder %s11, 3
      %p99 = pnand %p97, %p98
      %p100 = pneg %p99
      // Predicated region
      $region9: #{tpu_custom_call.1} parent=5 // pred_check
        _
      $region10: #{tpu_custom_call.1} parent=5 // pred_check_branch
        %102 = sbr.rel (%p99) target = $region12
      $region11: #{tpu_custom_call.1} parent=5 // pred_region
        %s103 = ssub.s32 %s11, 1
      $region12: #{tpu_custom_call.1} parent=5 // pred_fallthru
        _
      %p104 = scmp.lt.s32.totalorder %s11, 2
      // Predicated region
      $region13: #{tpu_custom_call.1} parent=5 // pred_check
        %p105 = pneg %p104
      $region14: #{tpu_custom_call.1} parent=5 // pred_check_branch
        %107 = sbr.rel (%p105) target = $region16
      $region15: #{tpu_custom_call.1} parent=5 // pred_region
        // Predicated region
        $region17: #{tpu_custom_call.1} parent=15 // pred_check
          %p108 = pneg %p31
        $region18: #{tpu_custom_call.1} parent=15 // pred_check_branch
          %110 = sbr.rel (%p108) target = $region20
        $region19: #{tpu_custom_call.1} parent=15 // pred_region
          %p111 = scmp.lt.s32.totalorder %s11, 1
          %s112 = scalar_select %p111, %s11, 1
          %s113 = smul.addr %s112, 8
          %s114 = scalar_lea.vmem %s0, %s113
        $region20: #{tpu_custom_call.1} parent=15 // pred_fallthru
          _
        // Predicated region
        $region21: #{tpu_custom_call.1} parent=15 // pred_check
          %p115 = pneg %p57
        $region22: #{tpu_custom_call.1} parent=15 // pred_check_branch
          %117 = sbr.rel (%p115) target = $region24
        $region23: #{tpu_custom_call.1} parent=15 // pred_region
          %p118 = scmp.lt.s32.totalorder %s11, 1
          %s119 = scalar_select %p118, %s11, 1
          %s120 = smul.addr %s119, 8
          %s121 = scalar_lea.vmem %s1, %s120
        $region24: #{tpu_custom_call.1} parent=15 // pred_fallthru
          _
      $region16: #{tpu_custom_call.1} parent=5 // pred_fallthru
        _
      %p122 = scmp.le.s32.totalorder 1, %s11
      %p123 = scmp.lt.s32.totalorder %s11, 3
      %p124 = pnand %p122, %p123
      %p125 = pneg %p124
      // Predicated region
      $region25: #{tpu_custom_call.1} parent=5 // pred_check
        _
      $region26: #{tpu_custom_call.1} parent=5 // pred_check_branch
        %127 = sbr.rel (%p124) target = $region28
      $region27: #{tpu_custom_call.1} parent=5 // pred_region
        %s128 = ssub.s32 %s11, 1
        %p129 = scmp.lt.s32.totalorder %s16, 1
        %s130 = scalar_select %p129, %s16, 1
        %s131 = smul.addr %s130, 8
        %s132 = scalar_lea.vmem %s0, %s131
        %p133 = pneg %p37
        %p134 = pneg %p34
        %p135 = scmp.lt.s32.totalorder %s16, 1
        %s136 = scalar_select %p135, %s16, 1
        %s137 = smul.addr %s136, 8
        %s138 = scalar_lea.vmem %s1, %s137
        %p139 = pneg %p63
        %p140 = pneg %p60
        %p141 = pneg %p89
        %p142 = pneg %p86
        %s143 = sand.u32 %s76, 1
        %s144 = scalar_lea.sflag [#allocation3], %s143
        %s145 = sand.u32 %s76, 1
        %s146 = smul.addr %s145, 8
        %s147 = scalar_lea.vmem [#allocation2], %s146
        %p148 = scmp.lt.s32.totalorder %s16, 1
        %s149 = scalar_select %p148, %s16, 1
        %s150 = smul.addr %s149, 8
        %s151 = scalar_lea.vmem %s0, %s150
        %p152 = scmp.lt.s32.totalorder %s16, 1
        %s153 = scalar_select %p152, %s16, 1
        %s154 = smul.addr %s153, 8
        %s155 = scalar_lea.vmem %s1, %s154
        %v156 = vld [vmem:[%s151] sm:$0xff]
        %v157 = vld [vmem:[%s155] sm:$0xff]
        %vm158 = vcmask 261120
        %v159 = vsel %vm158, %v156, -inf
        %160 = vmax.xlane.f32.xlu0 %v159
        %v161 = vpop.xlane.xlu0 %160
        %v162 = vsub.f32 %v156, %v161
        %v163 = vmul.f32 %v162, 1.442695
        %v164 = vpow.pop %v163
        %v165 = vsel %vm158, %v164, 0.0
        %166 = vadd.xlane.f32.xlu0 %v165
        %v167 = vpop.xlane.xlu0 %166
        %v168 = vlog2.pop %v167
        %v169 = vmul.f32 %v168, 0.6931472
        %v170 = vlaneseq
        %v171 = vand.u32 %v170, 127
        %172 = vset.pattern.permute.xlu0 0
        %173 = vperm.xlu0 %172, %v157
        %v174 = vpop.permute.xlu0 %173
        %vm175 = vcmp.eq.s32.totalorder %v171, %v174
        %v176 = vsel %vm175, 0.9, 0.0032258064
        %v177 = vmul.f32 %v176, %v156
        %v178 = vsel %vm158, %v177, 0.0
        %179 = vadd.xlane.f32.xlu0 %v178
        %v180 = vpop.xlane.xlu0 %179
        %v181 = vsub.f32 -0.6684817, %v180
        %v182 = vadd.f32 %v181, %v161
        %v183 = vadd.f32 %v182, %v169
        %v184 = vlaneseq
        %v185 = vshrl.u32 %v184, 7
        %s186 = smul.u32 %s16, 8
        %v187 = vstv %s186
        %v188 = vadd.s32 %v185, %v187
        %vm189 = vcmp.lt.s32.totalorder %v188, 16
        %vm190 = vcmp.ne.s32.totalorder %v157, 4294967295
        %vm191 = vmand %vm189, %vm190
        %v192 = vsel %vm191, %v183, 0.0
        %vm193 = vcmask 7168
        %v194 = vsel %vm193, %v192, 0.0
        %195 = vadd.xlane.f32.xlu0 %v194
        %v196 = vpop.xlane.xlu0 %195
        %v197 = vrot.slane %v196, 4
        %v198 = vadd.f32 %v196, %v197
        %v199 = vrot.slane %v198, 2
        %v200 = vadd.f32 %v198, %v199
        %v201 = vrot.slane %v200, 1
        %v202 = vadd.f32 %v200, %v201
        %s203 = vtos %v202
        %v204 = vsel %vm191, 1, 0
        %v205 = vcvt.s32.f32 %v204
        %v206 = vsel %vm193, %v205, 0.0
        %207 = vadd.xlane.f32.xlu0 %v206
        %v208 = vpop.xlane.xlu0 %207
        %v209 = vrot.slane %v208, 4
        %v210 = vadd.f32 %v208, %v209
        %v211 = vrot.slane %v210, 2
        %v212 = vadd.f32 %v210, %v211
        %v213 = vrot.slane %v212, 1
        %v214 = vadd.f32 %v212, %v213
        %s215 = vtos %v214
        %vm216 = vcmp.eq.s32.totalorder %v185, 0
        %vm217 = vcmp.eq.s32.totalorder %v171, 0
        %vm218 = vmand %vm216, %vm217
        %vm219 = vcmp.eq.s32.totalorder %v171, 1
        %vm220 = vmand %vm216, %vm219
        %v221 = vstv %s215
        %v222 = vsel %vm220, %v221, 0.0
        %v223 = vstv %s203
        %v224 = vsel %vm218, %v223, %v222
        %225 = vst [vmem:[%s147] sm:$0xff] %v224
        %s226 = sand.u32 %s76, 1
        %s227 = scalar_lea.sflag [#allocation3], %s226
        %s228 = sand.u32 %s76, 1
        %s229 = smul.addr %s228, 8
        %s230 = scalar_lea.vmem [#allocation2], %s229
        // Predicated region
        $region29: #{tpu_custom_call.1} parent=27 // pred_check
          %p231 = pneg %p86
        $region30: #{tpu_custom_call.1} parent=27 // pred_check_branch
          %233 = sbr.rel (%p231) target = $region32
        $region31: #{tpu_custom_call.1} parent=27 // pred_region
          %s235 = ssub.s32 128, 128
          %236 = vsyncadd %s227, %s235
          %s237 = smul.addr %s16, 128
          %s238 = scalar_lea.hbm %s2, %s237
          %s240 = sshll.u32 %s230, 4
          %s241 = int_to_ptr.vmem [resolvable:$true] %s240
          %243 = dma.vmem_to_hbm [thread:$0]  %s241, 128, %s238, %s227
        $region32: #{tpu_custom_call.1} parent=27 // pred_fallthru
          _
      $region28: #{tpu_custom_call.1} parent=5 // pred_fallthru
        _
      %p244 = scmp.le.s32.totalorder 2, %s11
      // Predicated region
      $region33: #{tpu_custom_call.1} parent=5 // pred_check
        %p245 = pneg %p244
      $region34: #{tpu_custom_call.1} parent=5 // pred_check_branch
        %247 = sbr.rel (%p245) target = $region36
      $region35: #{tpu_custom_call.1} parent=5 // pred_region
        %s248 = ssub.s32 %s11, 2
        // Predicated region
        $region37: #{tpu_custom_call.1} parent=35 // pred_check
          %p249 = pneg %p92
        $region38: #{tpu_custom_call.1} parent=35 // pred_check_branch
          %251 = sbr.rel (%p249) target = $region40
        $region39: #{tpu_custom_call.1} parent=35 // pred_region
          %s252 = sand.u32 %s77, 1
          %s253 = scalar_lea.sflag [#allocation3], %s252
          %s254 = sand.u32 %s77, 1
          %s255 = smul.addr %s254, 8
          %s256 = scalar_lea.vmem [#allocation2], %s255
          %257 = dma.done %s253, 128
        $region40: #{tpu_custom_call.1} parent=35 // pred_fallthru
          _
      $region36: #{tpu_custom_call.1} parent=5 // pred_fallthru
        _
    $region6: #{tpu_custom_call.1} parent=1 // loop_footer
      %s15 = sadd.s32 1, %s11
    $region7: #{tpu_custom_call.1} parent=1 // loop_footer_branch
      %10 = sbr.rel target = $region3
    $region8: #{tpu_custom_call.1} parent=1 // loop_exit
      _
    %258 = vsyncpa [#allocation3], 1
    %s259 = scalar_lea.sflag [#allocation3], 1
    %260 = vsyncpa %s259, 1

</llo_original>
